<compile_context>
chip_gen: v6e
topology: v6e:2x2x1
jax: 0.10.0
libtpu: 0.0.40
codegen_flags: <defaults>
</compile_context>

<pallas_src>
import jax
import jax.numpy as jnp
from jax import lax
from jax.experimental import pallas as pl
from jax.experimental.pallas import tpu as pltpu


def _stochastic_shift_kernel(shift_ref, x_ref, o_ref):
    """shift_ref: (1,) int32 in SMEM (scalar-prefetched). x_ref/o_ref: (R, L)."""
    s = shift_ref[0]                          # dynamic shift scalar (int32)
    rows, L = x_ref.shape

    # Effective rotate amount (the original code double-shifts when s > 0).
    shift_eff = jnp.where(s > 0, 2 * s, s)
    shift_pos = jnp.mod(shift_eff, L)         # non-negative rotate amount in [0, L)

    # Dynamic lane rotate on the XLU: rolled[r, j] = x[r, (j - shift_eff) mod L]
    rolled = pltpu.roll(x_ref[...], shift_pos, axis=1)

    # Zero-fill mask: valid output positions are [max(s,0), L + min(s,0)).
    lo = jnp.maximum(s, 0)
    hi = L + jnp.minimum(s, 0)
    j = lax.broadcasted_iota(jnp.int32, (rows, L), 1)
    valid = jnp.logical_and(j >= lo, j < hi)

    o_ref[...] = jnp.where(valid, rolled, jnp.zeros_like(rolled))


def stochastic_shift(x, shift, *, tile_rows=None):
    """x: (B, C, L) float array; shift: int32 scalar in [-max_shift, max_shift]."""
    B, C, L = x.shape
    BC = B * C
    itemsize = jnp.dtype(x.dtype).itemsize

    x2 = x.reshape(BC, L)                                  # glue reshape (plain JAX)
    shift_arr = jnp.asarray(shift, dtype=jnp.int32).reshape(1)

    if tile_rows is None:
        # ~4 MiB per input block -> with double-buffered in + out (~16 MiB total)
        # this stays well under v7x's 64 MiB physical / 32 MiB scoped-default VMEM.
        target_bytes = 4 * 1024 * 1024
        tile_rows = max(1, target_bytes // (L * itemsize))
        tile_rows = min(tile_rows, BC)
        if tile_rows >= 8:
            tile_rows = (tile_rows // 8) * 8               # sublane multiple of 8
        else:
            tile_rows = BC                                 # tiny case: whole row axis

    num_tiles = pl.cdiv(BC, tile_rows)

    grid_spec = pltpu.PrefetchScalarGridSpec(
        num_scalar_prefetch=1,                             # shift scalar -> SMEM
        grid=(num_tiles,),
        in_specs=[pl.BlockSpec((tile_rows, L), lambda i, s_ref: (i, 0))],
        out_specs=pl.BlockSpec((tile_rows, L), lambda i, s_ref: (i, 0)),
    )

    out2 = pl.pallas_call(
        _stochastic_shift_kernel,
        out_shape=jax.ShapeDtypeStruct((BC, L), x.dtype),
        grid_spec=grid_spec,
        compiler_params=pltpu.CompilerParams(
            dimension_semantics=("parallel",)),            # megacore sharding on v7x
        cost_estimate=pl.CostEstimate(
            flops=0, transcendentals=0,
            bytes_accessed=2 * BC * L * itemsize),         # mem-bound copy hint
    )(shift_arr, x2)
    return out2.reshape(B, C, L)


def _reference(x, s):
    """Pure-JAX transcription of the PyTorch forward for a fixed shift s."""
    s = int(s)
    x = jnp.roll(x, s, axis=-1)
    if s > 0:
        pad = jnp.zeros((x.shape[0], x.shape[1], s), x.dtype)
        x = jnp.concatenate([pad, x[:, :, :-s]], axis=-1)
    elif s < 0:
        pad = jnp.zeros((x.shape[0], x.shape[1], -s), x.dtype)
        x = jnp.concatenate([x[:, :, :s], pad], axis=-1)
    return x


if __name__ == "__main__":
    max_shift = 3
    key = jax.random.PRNGKey(0)
    kx, ks = jax.random.split(key)
    x = jax.random.normal(kx, (2, 4, 128), dtype=jnp.float32)

    shift_fn = jax.jit(stochastic_shift)

    # The module's torch.randint(-max_shift, max_shift + 1) draw, made deterministic.
    shift = jax.random.randint(ks, (1,), -max_shift, max_shift + 1, dtype=jnp.int32)[0]
    out = jax.block_until_ready(shift_fn(x, shift))
    ref = _reference(x, shift)
    assert out.shape == x.shape and out.dtype == x.dtype
    assert jnp.array_equal(out, ref)

    # Exhaustive check over every possible shift value (same compiled kernel).
    for s in range(-max_shift, max_shift + 1):
        out_s = jax.block_until_ready(shift_fn(x, jnp.int32(s)))
        ref_s = _reference(x, s)
        assert jnp.array_equal(out_s, ref_s), f"mismatch at shift={s}"

    print("KERNEL_OK")
</pallas_src>

<mosaic_0001>
module attributes {stable_mosaic.version = 11 : i64} {
  func.func @_stochastic_shift_kernel(%arg0: i32, %arg1: memref<1xi32, #tpu.memory_space<smem>>, %arg2: memref<8x128xf32, #tpu.memory_space<vmem>>, %arg3: memref<8x128xf32, #tpu.memory_space<vmem>>) attributes {dimension_semantics = [#tpu.dimension_semantics<parallel>], iteration_bounds = array<i64: 1>, scalar_prefetch = 1 : i64, scratch_operands = 0 : i64, tpu.core_type = #tpu.core_type<tc>, window_params = [{transform_indices = @transform_0, window_bounds = array<i64: 8, 128>}, {transform_indices = @transform_1, window_bounds = array<i64: 8, 128>}]} {
    %c0 = arith.constant 0 : index
    %0 = memref.load %arg1[%c0] : memref<1xi32, #tpu.memory_space<smem>>
    %c0_i32 = arith.constant 0 : i32
    %1 = arith.cmpi sgt, %0, %c0_i32 : i32
    %c2_i32 = arith.constant 2 : i32
    %2 = arith.muli %c2_i32, %0 : i32
    %3 = arith.select %1, %2, %0 : i32
    %c128_i32 = arith.constant 128 : i32
    %c0_i32_0 = arith.constant 0 : i32
    %4 = arith.cmpi eq, %c128_i32, %c0_i32_0 : i32
    %c1_i32 = arith.constant 1 : i32
    %5 = arith.select %4, %c1_i32, %c128_i32 : i32
    %6 = arith.remsi %3, %5 : i32
    %c0_i32_1 = arith.constant 0 : i32
    %7 = arith.cmpi ne, %6, %c0_i32_1 : i32
    %c0_i32_2 = arith.constant 0 : i32
    %8 = arith.cmpi slt, %6, %c0_i32_2 : i32
    %c0_i32_3 = arith.constant 0 : i32
    %9 = arith.cmpi slt, %5, %c0_i32_3 : i32
    %10 = arith.xori %8, %9 : i1
    %11 = arith.andi %10, %7 : i1
    %12 = arith.addi %6, %5 : i32
    %13 = arith.select %11, %12, %6 : i32
    %c0_4 = arith.constant 0 : index
    %c0_5 = arith.constant 0 : index
    %14 = vector.load %arg2[%c0_4, %c0_5] : memref<8x128xf32, #tpu.memory_space<vmem>>, vector<8x128xf32>
    %15 = tpu.dynamic_rotate %14 by %13 dim 1 : vector<8x128xf32>, i32 -> vector<8x128xf32>
    %c0_i32_6 = arith.constant 0 : i32
    %16 = arith.maxsi %0, %c0_i32_6 : i32
    %c0_i32_7 = arith.constant 0 : i32
    %17 = arith.minsi %0, %c0_i32_7 : i32
    %c128_i32_8 = arith.constant 128 : i32
    %18 = arith.addi %c128_i32_8, %17 : i32
    %19 = tpu.iota {dimensions = array<i32: 1>} : vector<8x128xi32>
    %20 = vector.broadcast %16 : i32 to vector<8x128xi32>
    %21 = arith.cmpi sge, %19, %20 : vector<8x128xi32>
    %22 = vector.broadcast %18 : i32 to vector<8x128xi32>
    %23 = arith.cmpi slt, %19, %22 : vector<8x128xi32>
    %24 = arith.andi %21, %23 : vector<8x128xi1>
    %cst = arith.constant 0.000000e+00 : f32
    %25 = vector.broadcast %cst : f32 to vector<8x128xf32>
    %26 = arith.select %24, %15, %25 : vector<8x128xi1>, vector<8x128xf32>
    %c0_9 = arith.constant 0 : index
    %c0_10 = arith.constant 0 : index
    %27 = vector.load %arg3[%c0_9, %c0_10] : memref<8x128xf32, #tpu.memory_space<vmem>>, vector<8x128xf32>
    tpu.vector_store %arg3[%c0_9, %c0_10], %26 {strides = array<i32>} : memref<8x128xf32, #tpu.memory_space<vmem>>, vector<8x128xf32>,
    return
  }
  func.func @transform_0(%arg0: i32, %arg1: memref<1xi32, #tpu.memory_space<smem>>) -> (i32, i32) {
    %c0_i32 = arith.constant 0 : i32
    %c0_i32_0 = arith.constant 0 : i32
    return %arg0, %c0_i32 : i32, i32
  }
  func.func @transform_1(%arg0: i32, %arg1: memref<1xi32, #tpu.memory_space<smem>>) -> (i32, i32) {
    %c0_i32 = arith.constant 0 : i32
    %c0_i32_0 = arith.constant 0 : i32
    return %arg0, %c0_i32 : i32, i32
  }
}

</mosaic_0001>

<llo_original>
// kernel: stochastic_shift.1
$region0: #{stochastic_shift.1}
  #allocation0 [shape = 'u32[]', space=smem, size = 0x4, offset = 0x4, fixed_abs, tag = 'smem constant byte address 0x4 - core index']
  #allocation1 [shape = 'u32[144,128]{1,0:T(1,128)}', space=vmem, size = 0x12000, scoped, tag = 'internal scratch']
  #allocation2 [shape = 's32[1]{0}', space=sflag, size = 0x4, scoped, tag = 'scoped memory for stochastic_shift.1']
  #allocation3 [shape = 's32[1]{0:T(128)S(6)}', space=smem, size = 0x200, scoped, tag = 'prefetched SMEM operand 0']
  %s0 = inlined_call_operand.<no memory space> [shape: s32[1], index: 0, kind: input, shape index: {}]
  %s1 = inlined_call_operand.hbm [shape: f32[8,128], index: 1, kind: input, shape index: {}]
  %s2 = inlined_call_operand.hbm [shape: f32[8,128], index: 2, kind: output, shape index: {}]
  %s3 = sld [smem:[#allocation0]]
  $region18: #{stochastic_shift.1} parent=0
    _
  %s5 = ssub.s32 1, %s3
  %s6 = scalar_select 0, %s5, %s3
  %7 = sst [smem:[#allocation3]] %s0
  $region1: #{stochastic_shift.1} parent=0
    #allocation4 [shape = 'u8[4096]{0}', space=vmem, size = 0x1000, scoped, tag = 'input window, operand 1, single buffered']
    #allocation5 [shape = 's32[1]{0}', space=sflag, size = 0x4, scoped, tag = 'scoped memory for stochastic_shift.1']
    #allocation6 [shape = 's32[1]{0}', space=sflag, size = 0x4, scoped, tag = 'scoped memory for stochastic_shift.1']
    #allocation7 [shape = 'u8[4096]{0}', space=vmem, size = 0x1000, scoped, tag = 'output window, operand 0, single buffered']
    %8 = vsyncpa [#allocation5], 0
    %9 = vsyncpa [#allocation6], 0
    // Predicated region
    $region2: #{stochastic_shift.1} parent=1 // pred_check
      _
    $region3: #{stochastic_shift.1} parent=1 // pred_check_branch
      %11 = sbr.rel (0) target = $region5
    $region4: #{stochastic_shift.1} parent=1 // pred_region
      %s13 = ssub.s32 128, 128
      %14 = vsyncadd [#allocation5], %s13
      %s16 = sshll.u32 [#allocation4], 4
      %s17 = int_to_ptr.vmem [resolvable:$true] %s16
      %19 = dma.hbm_to_vmem [thread:$0]  %s1, 128, %s17, [#allocation5]
    $region5: #{stochastic_shift.1} parent=1 // pred_fallthru
      _
    // Predicated region
    $region6: #{stochastic_shift.1} parent=1 // pred_check
      _
    $region7: #{stochastic_shift.1} parent=1 // pred_check_branch
      %21 = sbr.rel (0) target = $region9
    $region8: #{stochastic_shift.1} parent=1 // pred_region
      %22 = dma.done [#allocation5], 128
    $region9: #{stochastic_shift.1} parent=1 // pred_fallthru
      _
    %s23 = sld [smem:[#allocation3]]
    %p24 = scmp.gt.s32.totalorder %s23, 0
    %s25 = smul.u32 %s23, 2
    %s26 = scalar_select %p24, %s25, %s23
    %p27 = scmp.lt.s32.totalorder %s26, 0
    %s28 = ssub.s32 0, %s26
    %s29 = scalar_select %p27, %s28, %s26
    %s30 = sand.u32 %s29, 127
    %s31 = ssub.s32 0, %s30
    %s32 = scalar_select %p27, %s31, %s30
    %p33 = scmp.ne.s32.totalorder %s32, 0
    %p34 = scmp.lt.s32.totalorder %s32, 0
    %p35 = pnand %p34, %p33
    %p36 = pneg %p35
    %s37 = sadd.s32 %s32, 128
    %s38 = scalar_select %p36, %s37, %s32
    %v39 = vld [vmem:[#allocation4] sm:$0xff]
    %s40 = sand.u32 %s38, 127
    %s41 = sand.u32 %s40, 127
    %42 = vrot.lane.b32.xlu0 %v39, %s41
    %v43 = vpop.permute.xlu0 %42
    %p44 = scmp.gt.s32.totalorder %s23, 0
    %s45 = scalar_select %p44, %s23, 0
    %p46 = scmp.lt.s32.totalorder %s23, 0
    %s47 = scalar_select %p46, %s23, 0
    %s48 = sadd.s32 %s47, 128
    %v49 = vlaneseq
    %v50 = vand.u32 %v49, 127
    %v51 = vstv %s45
    %vm52 = vcmp.ge.s32.totalorder %v50, %v51
    %v53 = vstv %s48
    %vm54 = vcmp.lt.s32.totalorder %v50, %v53
    %vm55 = vmand %vm52, %vm54
    %v56 = vsel %vm55, %v43, 0.0
    %57 = vst [vmem:[#allocation7] sm:$0xff] %v56
    // Predicated region
    $region10: #{stochastic_shift.1} parent=1 // pred_check
      _
    $region11: #{stochastic_shift.1} parent=1 // pred_check_branch
      %59 = sbr.rel (0) target = $region13
    $region12: #{stochastic_shift.1} parent=1 // pred_region
      %s61 = ssub.s32 128, 128
      %62 = vsyncadd [#allocation6], %s61
      %s64 = sshll.u32 [#allocation7], 4
      %s65 = int_to_ptr.vmem [resolvable:$true] %s64
      %67 = dma.vmem_to_hbm [thread:$0]  %s65, 128, %s2, [#allocation6]
    $region13: #{stochastic_shift.1} parent=1 // pred_fallthru
      _
    // Predicated region
    $region14: #{stochastic_shift.1} parent=1 // pred_check
      _
    $region15: #{stochastic_shift.1} parent=1 // pred_check_branch
      %69 = sbr.rel (0) target = $region17
    $region16: #{stochastic_shift.1} parent=1 // pred_region
      %70 = dma.done [#allocation6], 128
    $region17: #{stochastic_shift.1} parent=1 // pred_fallthru
      _
    %71 = vsyncpa [#allocation5], 1
    %72 = vsyncpa [#allocation6], 1

</llo_original>
